<compile_context>
chip_gen: v5e
topology: v5e:2x2
jax: 0.10.0
libtpu: 0.0.40
codegen_flags: <defaults>
</compile_context>

<pallas_src>
import functools

import jax
import jax.numpy as jnp
from jax.experimental import pallas as pl
from jax.experimental.pallas import tpu as pltpu

_LANES = 128
_NEG_FILL = -1.0e4   # focal padding logit: sigmoid ~= 0, target = 0 -> loss exactly 0
_AF_EPS = 1e-12      # guards 1/avg_factor when avg_factor == 0


def _round_up(x, m):
    return ((x + m - 1) // m) * m


# ---------------------------------------------------------------------------
# Fused kernel (grid over classification row tiles; small losses at last step)
# ---------------------------------------------------------------------------
def _fused_loss_kernel(inv_af_ref,                       # SMEM (4,): 1/avg_factor
                       cls_p_ref, cls_t_ref,             # (tile_r, 128) per grid step
                       bb_p_ref, bb_t_ref, bb_w_ref,     # (4,Mb,128) x2, (Mb,128)
                       al_p_ref, al_t_ref, al_w_ref,     # (Ma,128) x3
                       ct_p_ref, ct_t_ref, ct_w_ref,     # (Mc,128) x3
                       out_ref,                          # (1, 128) lane-dense result
                       acc_ref,                          # VMEM (1,1) focal accumulator
                       *, alpha, beta):
    step = pl.program_id(0)

    @pl.when(step == 0)
    def _init():
        acc_ref[...] = jnp.zeros_like(acc_ref)

    # ---- sigmoid focal loss (gamma = 2), partial sum over this row tile ----
    x = cls_p_ref[...]
    t = cls_t_ref[...]
    e = jnp.exp(-jnp.abs(x))                     # exp(-|x|)           (1 EUP exp)
    lg = jnp.log(1.0 + e)                        # log(1 + exp(-|x|))  (1 EUP log)
    log_p = jnp.minimum(x, 0.0) - lg             # log(sigmoid(x))
    log_1p = log_p - x                           # log(1 - sigmoid(x))
    r = pl.reciprocal(1.0 + e, approx=True)      # EUP vrcp (cheap)
    p = jnp.where(x >= 0, r, e * r)              # sigmoid(x), overflow free
    one_m_p = 1.0 - p
    focal = -(alpha * (one_m_p * one_m_p) * t * log_p
              + (1.0 - alpha) * (p * p) * (1.0 - t) * log_1p)
    acc_ref[...] += jnp.sum(focal, axis=(0, 1), keepdims=True)

    @pl.when(step == pl.num_programs(0) - 1)
    def _finalize():
        eps = 1e-6

        # ---- GIoU loss on lane-dense (Mb,128) coordinate planes ----
        px1, py1, px2, py2 = bb_p_ref[0], bb_p_ref[1], bb_p_ref[2], bb_p_ref[3]
        tx1, ty1, tx2, ty2 = bb_t_ref[0], bb_t_ref[1], bb_t_ref[2], bb_t_ref[3]
        w_b = bb_w_ref[...]
        area_p = (px2 - px1) * (py2 - py1)
        area_t = (tx2 - tx1) * (ty2 - ty1)
        iw = jnp.maximum(jnp.minimum(px2, tx2) - jnp.maximum(px1, tx1), 0.0)
        ih = jnp.maximum(jnp.minimum(py2, ty2) - jnp.maximum(py1, ty1), 0.0)
        inter = iw * ih
        union = area_p + area_t - inter + eps
        iou = inter / union
        enclose = ((jnp.maximum(px2, tx2) - jnp.minimum(px1, tx1))
                   * (jnp.maximum(py2, ty2) - jnp.minimum(py1, ty1)) + eps)
        giou = iou - (enclose - union) / enclose
        giou_sum = jnp.sum((1.0 - giou) * w_b, axis=(0, 1), keepdims=True)

        # ---- smooth-L1 loss (alpha regression) ----
        d = jnp.abs(al_p_ref[...] - al_t_ref[...])
        sl1 = jnp.where(d < beta, 0.5 * d * d / beta, d - 0.5 * beta) * al_w_ref[...]
        sl1_sum = jnp.sum(sl1, axis=(0, 1), keepdims=True)

        # ---- BCE-with-logits loss (centerness) ----
        xc = ct_p_ref[...]
        tc = ct_t_ref[...]
        bce = (jnp.maximum(xc, 0.0) - xc * tc
               + jnp.log(1.0 + jnp.exp(-jnp.abs(xc)))) * ct_w_ref[...]
        bce_sum = jnp.sum(bce, axis=(0, 1), keepdims=True)

        # ---- normalize by avg_factor (precomputed reciprocal from SMEM) ----
        cls_l = acc_ref[...] * inv_af_ref[0]
        giou_l = giou_sum * inv_af_ref[1]
        sl1_l = sl1_sum * inv_af_ref[2]
        bce_l = bce_sum * inv_af_ref[3]

        # pack the four scalars into lanes 0..3 of one lane-dense output row
        lane = jax.lax.broadcasted_iota(jnp.int32, (1, _LANES), 1)
        out_ref[...] = (jnp.where(lane == 0, cls_l, 0.0)
                        + jnp.where(lane == 1, giou_l, 0.0)
                        + jnp.where(lane == 2, sl1_l, 0.0)
                        + jnp.where(lane == 3, bce_l, 0.0))


# ---------------------------------------------------------------------------
# Host-side layout plumbing + single pallas_call
# ---------------------------------------------------------------------------
def _lane_planes(v, n_pad):
    """Flatten, zero-pad to n_pad elements, reshape lane-dense (n_pad/128, 128)."""
    v = jnp.ravel(v).astype(jnp.float32)
    v = jnp.pad(v, (0, n_pad - v.shape[0]))
    return v.reshape(-1, _LANES)


def _box_planes(b, n_pad):
    """(N,4) xyxy boxes -> (4, n_pad/128, 128) per-coordinate lane-dense planes."""
    b = jnp.reshape(b, (-1, 4)).astype(jnp.float32)
    b = jnp.pad(b, ((0, n_pad - b.shape[0]), (0, 0)))
    return jnp.transpose(b).reshape(4, -1, _LANES)


@functools.partial(jax.jit,
                   static_argnames=("focal_alpha", "focal_gamma",
                                    "smooth_l1_beta", "cls_tile_rows"))
def vehicle_side_fcos_losses(cls_pred, cls_target, cls_avg_factor,
                             bbox_pred, bbox_target, bbox_weight, bbox_avg_factor,
                             alpha_pred, alpha_target, alpha_weight, alpha_avg_factor,
                             ctr_pred, ctr_target, ctr_weight, ctr_avg_factor,
                             *, focal_alpha=0.25, focal_gamma=2.0,
                             smooth_l1_beta=1.0, cls_tile_rows=512):
    """Returns a (1, 128) f32 array with the 4 losses in lanes 0..3."""
    assert focal_gamma == 2.0, "gamma=2 is hard-coded (explicit square) in the kernel"
    assert cls_tile_rows % 8 == 0
    f32 = jnp.float32

    # ---- classification tensors: lane+sublane dense, padded, row tiled ----
    cp = jnp.ravel(cls_pred).astype(f32)
    ct = jnp.ravel(cls_target).astype(f32)
    n_elem = cp.shape[0]
    rows = pl.cdiv(n_elem, _LANES)
    tile_r = min(cls_tile_rows, _round_up(rows, 8))
    rows_pad = _round_up(rows, tile_r)
    pad = rows_pad * _LANES - n_elem
    cp = jnp.pad(cp, (0, pad), constant_values=_NEG_FILL).reshape(rows_pad, _LANES)
    ct = jnp.pad(ct, (0, pad)).reshape(rows_pad, _LANES)
    n_tiles = rows_pad // tile_r

    # ---- positive-sample tensors: zero-weight padded lane-dense planes ----
    nb = jnp.reshape(bbox_pred, (-1, 4)).shape[0]
    nb_pad = _round_up(max(nb, 1), _LANES)
    bp = _box_planes(bbox_pred, nb_pad)
    bt = _box_planes(bbox_target, nb_pad)
    bw = _lane_planes(bbox_weight, nb_pad)

    na = jnp.ravel(alpha_pred).shape[0]
    na_pad = _round_up(max(na, 1), _LANES)
    ap = _lane_planes(alpha_pred, na_pad)
    at = _lane_planes(alpha_target, na_pad)
    aw = _lane_planes(alpha_weight, na_pad)

    nc = jnp.ravel(ctr_pred).shape[0]
    nc_pad = _round_up(max(nc, 1), _LANES)
    ctp = _lane_planes(ctr_pred, nc_pad)
    ctt = _lane_planes(ctr_target, nc_pad)
    ctw = _lane_planes(ctr_weight, nc_pad)

    # ---- 1/avg_factor through SMEM (precomputed reciprocal, eps-guarded) ----
    af = jnp.stack([jnp.asarray(cls_avg_factor, f32).reshape(()),
                    jnp.asarray(bbox_avg_factor, f32).reshape(()),
                    jnp.asarray(alpha_avg_factor, f32).reshape(()),
                    jnp.asarray(ctr_avg_factor, f32).reshape(())])
    inv_af = 1.0 / jnp.maximum(af, _AF_EPS)

    kernel = functools.partial(_fused_loss_kernel,
                               alpha=float(focal_alpha),
                               beta=float(smooth_l1_beta))

    grid_spec = pltpu.PrefetchScalarGridSpec(
        num_scalar_prefetch=1,
        grid=(n_tiles,),
        in_specs=[
            pl.BlockSpec((tile_r, _LANES), lambda i, inv: (i, 0)),   # cls pred tile
            pl.BlockSpec((tile_r, _LANES), lambda i, inv: (i, 0)),   # cls target tile
            pl.BlockSpec(bp.shape, lambda i, inv: (0, 0, 0)),        # bbox pred planes
            pl.BlockSpec(bt.shape, lambda i, inv: (0, 0, 0)),        # bbox target planes
            pl.BlockSpec(bw.shape, lambda i, inv: (0, 0)),           # bbox weight
            pl.BlockSpec(ap.shape, lambda i, inv: (0, 0)),           # alpha pred
            pl.BlockSpec(at.shape, lambda i, inv: (0, 0)),           # alpha target
            pl.BlockSpec(aw.shape, lambda i, inv: (0, 0)),           # alpha weight
            pl.BlockSpec(ctp.shape, lambda i, inv: (0, 0)),          # centerness pred
            pl.BlockSpec(ctt.shape, lambda i, inv: (0, 0)),          # centerness target
            pl.BlockSpec(ctw.shape, lambda i, inv: (0, 0)),          # centerness weight
        ],
        out_specs=pl.BlockSpec((1, _LANES), lambda i, inv: (0, 0)),
        scratch_shapes=[pltpu.VMEM((1, 1), jnp.float32)],
    )

    return pl.pallas_call(
        kernel,
        out_shape=jax.ShapeDtypeStruct((1, _LANES), jnp.float32),
        grid_spec=grid_spec,
        compiler_params=pltpu.CompilerParams(
            dimension_semantics=("arbitrary",)),
    )(inv_af, cp, ct, bp, bt, bw, ap, at, aw, ctp, ctt, ctw)


class VehicleSideFCOSLossPallas:
    """JAX/Pallas equivalent of VehicleSideFCOSLoss (single fused kernel)."""

    def __init__(self, focal_alpha=0.25, focal_gamma=2.0,
                 smooth_l1_beta=1.0, cls_tile_rows=512):
        self.focal_alpha = focal_alpha
        self.focal_gamma = focal_gamma
        self.smooth_l1_beta = smooth_l1_beta
        self.cls_tile_rows = cls_tile_rows

    def __call__(self, pred, target):
        assert len(target) == 4
        cls_t, bbox_t, alpha_t, ctr_t = target
        packed = vehicle_side_fcos_losses(
            cls_t["pred"], cls_t["target"], cls_t["avg_factor"],
            bbox_t["pred"], bbox_t["target"], bbox_t["weight"], bbox_t["avg_factor"],
            alpha_t["pred"], alpha_t["target"], alpha_t["weight"], alpha_t["avg_factor"],
            ctr_t["pred"], ctr_t["target"], ctr_t["weight"], ctr_t["avg_factor"],
            focal_alpha=self.focal_alpha, focal_gamma=self.focal_gamma,
            smooth_l1_beta=self.smooth_l1_beta, cls_tile_rows=self.cls_tile_rows)
        cls_res = {"vehicle_side_cls_loss": packed[0, 0]}
        reg_bbox_res = {"vehicle_side_reg_bbox_loss": packed[0, 1]}
        reg_alpha_res = {"vehicle_side_reg_alpha_loss": packed[0, 2]}
        ctr_res = {"vehicle_side_centerness_loss": packed[0, 3]}
        res = {}
        res.update(cls_res)
        res.update(reg_bbox_res)
        res.update(reg_alpha_res)
        res.update(ctr_res)
        assert len(res) == (len(cls_res) + len(reg_bbox_res)
                            + len(reg_alpha_res) + len(ctr_res))
        return res


# ---------------------------------------------------------------------------
# Pure-JAX reference (for numerical validation of the fused kernel)
# ---------------------------------------------------------------------------
def _reference_losses(targets, focal_alpha=0.25, beta=1.0):
    cls_t, bbox_t, alpha_t, ctr_t = targets
    f32 = jnp.float32
    # focal (gamma = 2)
    x = cls_t["pred"].astype(f32)
    t = cls_t["target"].astype(f32)
    p = jax.nn.sigmoid(x)
    log_p = jax.nn.log_sigmoid(x)
    log_1p = log_p - x
    focal = -(focal_alpha * (1 - p) ** 2 * t * log_p
              + (1 - focal_alpha) * p ** 2 * (1 - t) * log_1p)
    cls_loss = focal.sum() / cls_t["avg_factor"]
    # GIoU
    pb = bbox_t["pred"].astype(f32)
    tb = bbox_t["target"].astype(f32)
    w = jnp.ravel(bbox_t["weight"]).astype(f32)
    eps = 1e-6
    area_p = (pb[:, 2] - pb[:, 0]) * (pb[:, 3] - pb[:, 1])
    area_t = (tb[:, 2] - tb[:, 0]) * (tb[:, 3] - tb[:, 1])
    iw = jnp.maximum(jnp.minimum(pb[:, 2], tb[:, 2]) - jnp.maximum(pb[:, 0], tb[:, 0]), 0)
    ih = jnp.maximum(jnp.minimum(pb[:, 3], tb[:, 3]) - jnp.maximum(pb[:, 1], tb[:, 1]), 0)
    inter = iw * ih
    union = area_p + area_t - inter + eps
    iou = inter / union
    enclose = ((jnp.maximum(pb[:, 2], tb[:, 2]) - jnp.minimum(pb[:, 0], tb[:, 0]))
               * (jnp.maximum(pb[:, 3], tb[:, 3]) - jnp.minimum(pb[:, 1], tb[:, 1])) + eps)
    giou = iou - (enclose - union) / enclose
    bbox_loss = ((1 - giou) * w).sum() / bbox_t["avg_factor"]
    # smooth L1
    d = jnp.abs(jnp.ravel(alpha_t["pred"]) - jnp.ravel(alpha_t["target"])).astype(f32)
    sl1 = jnp.where(d < beta, 0.5 * d * d / beta, d - 0.5 * beta) * jnp.ravel(alpha_t["weight"])
    alpha_loss = sl1.sum() / alpha_t["avg_factor"]
    # BCE with logits
    xc = jnp.ravel(ctr_t["pred"]).astype(f32)
    tc = jnp.ravel(ctr_t["target"]).astype(f32)
    bce = (jnp.maximum(xc, 0.0) - xc * tc
           + jnp.log1p(jnp.exp(-jnp.abs(xc)))) * jnp.ravel(ctr_t["weight"])
    ctr_loss = bce.sum() / ctr_t["avg_factor"]
    return {"vehicle_side_cls_loss": cls_loss,
            "vehicle_side_reg_bbox_loss": bbox_loss,
            "vehicle_side_reg_alpha_loss": alpha_loss,
            "vehicle_side_centerness_loss": ctr_loss}


# ---------------------------------------------------------------------------
# Example / smoke test
# ---------------------------------------------------------------------------
if __name__ == "__main__":
    key = jax.random.PRNGKey(0)
    k = jax.random.split(key, 10)

    # Small shapes consistent with flattened FCOS heads:
    #   N_points = 256 candidate locations, C = 8 classes, N_pos = 64 positives.
    n_points, n_cls, n_pos = 256, 8, 64

    # --- classification (sigmoid focal loss) ---
    cls_pred = jax.random.normal(k[0], (n_points, n_cls), jnp.float32)
    cls_labels = jax.random.randint(k[1], (n_points,), 0, n_cls)
    cls_target = jax.nn.one_hot(cls_labels, n_cls, dtype=jnp.float32)

    # --- bbox regression (GIoU loss, xyxy boxes) ---
    ctr = jax.random.uniform(k[2], (n_pos, 2), jnp.float32, 10.0, 100.0)
    sz_t = jax.random.uniform(k[3], (n_pos, 2), jnp.float32, 4.0, 40.0)
    sz_p = sz_t + jax.random.uniform(k[4], (n_pos, 2), jnp.float32, -2.0, 2.0)
    sz_p = jnp.maximum(sz_p, 1.0)
    bbox_target = jnp.concatenate([ctr - sz_t / 2, ctr + sz_t / 2], axis=-1)
    bbox_pred = jnp.concatenate([ctr - sz_p / 2, ctr + sz_p / 2], axis=-1)
    ctrness_weight = jax.random.uniform(k[5], (n_pos,), jnp.float32, 0.1, 1.0)

    # --- alpha regression (smooth L1) ---
    alpha_pred = jax.random.normal(k[6], (n_pos, 1), jnp.float32)
    alpha_target = jax.random.normal(k[7], (n_pos, 1), jnp.float32)
    alpha_weight = jnp.ones((n_pos, 1), jnp.float32)

    # --- centerness (BCE with logits) ---
    ctr_pred = jax.random.normal(k[8], (n_pos,), jnp.float32)
    ctr_target = jax.random.uniform(k[9], (n_pos,), jnp.float32, 0.0, 1.0)
    ctr_weight = jnp.ones((n_pos,), jnp.float32)

    num_pos = jnp.asarray(float(n_pos), jnp.float32)
    targets = (
        {"pred": cls_pred, "target": cls_target, "avg_factor": num_pos},
        {"pred": bbox_pred, "target": bbox_target, "weight": ctrness_weight,
         "avg_factor": jnp.sum(ctrness_weight)},
        {"pred": alpha_pred, "target": alpha_target, "weight": alpha_weight,
         "avg_factor": num_pos},
        {"pred": ctr_pred, "target": ctr_target, "weight": ctr_weight,
         "avg_factor": num_pos},
    )

    # cls_tile_rows=8 -> 2 grid tiles for the focal accumulation path at demo size
    loss_mod = VehicleSideFCOSLossPallas(cls_tile_rows=8)
    res = loss_mod(pred=None, target=targets)   # `pred` unused, like the PyTorch module
    res = jax.block_until_ready(res)

    ref = jax.block_until_ready(_reference_losses(targets))
    for name, v in res.items():
        assert v.shape == ()
        assert bool(jnp.isfinite(v)), f"{name} not finite"
        ok = jnp.allclose(v, ref[name], rtol=5e-2, atol=1e-4)
        assert bool(ok), f"{name}: pallas={float(v)} ref={float(ref[name])}"

    print("KERNEL_OK")
</pallas_src>

<mosaic_0001>
module attributes {stable_mosaic.version = 11 : i64} {
  func.func @_fused_loss_kernel(%arg0: i32, %arg1: memref<4xf32, #tpu.memory_space<smem>>, %arg2: memref<8x128xf32, #tpu.memory_space<vmem>>, %arg3: memref<8x128xf32, #tpu.memory_space<vmem>>, %arg4: memref<4x1x128xf32, #tpu.memory_space<vmem>>, %arg5: memref<4x1x128xf32, #tpu.memory_space<vmem>>, %arg6: memref<1x128xf32, #tpu.memory_space<vmem>>, %arg7: memref<1x128xf32, #tpu.memory_space<vmem>>, %arg8: memref<1x128xf32, #tpu.memory_space<vmem>>, %arg9: memref<1x128xf32, #tpu.memory_space<vmem>>, %arg10: memref<1x128xf32, #tpu.memory_space<vmem>>, %arg11: memref<1x128xf32, #tpu.memory_space<vmem>>, %arg12: memref<1x128xf32, #tpu.memory_space<vmem>>, %arg13: memref<1x128xf32, #tpu.memory_space<vmem>>, %arg14: memref<1x1xf32, #tpu.memory_space<vmem>>) attributes {dimension_semantics = [#tpu.dimension_semantics<arbitrary>], iteration_bounds = array<i64: 2>, scalar_prefetch = 1 : i64, scratch_operands = 1 : i64, tpu.core_type = #tpu.core_type<tc>, window_params = [{transform_indices = @transform_0, window_bounds = array<i64: 8, 128>}, {transform_indices = @transform_1, window_bounds = array<i64: 8, 128>}, {pipeline_mode = #tpu.pipeline_mode<synchronous>, transform_indices = @transform_2, window_bounds = array<i64: 4, 1, 128>}, {pipeline_mode = #tpu.pipeline_mode<synchronous>, transform_indices = @transform_3, window_bounds = array<i64: 4, 1, 128>}, {pipeline_mode = #tpu.pipeline_mode<synchronous>, transform_indices = @transform_4, window_bounds = array<i64: 1, 128>}, {pipeline_mode = #tpu.pipeline_mode<synchronous>, transform_indices = @transform_5, window_bounds = array<i64: 1, 128>}, {pipeline_mode = #tpu.pipeline_mode<synchronous>, transform_indices = @transform_6, window_bounds = array<i64: 1, 128>}, {pipeline_mode = #tpu.pipeline_mode<synchronous>, transform_indices = @transform_7, window_bounds = array<i64: 1, 128>}, {pipeline_mode = #tpu.pipeline_mode<synchronous>, transform_indices = @transform_8, window_bounds = array<i64: 1, 128>}, {pipeline_mode = #tpu.pipeline_mode<synchronous>, transform_indices = @transform_9, window_bounds = array<i64: 1, 128>}, {pipeline_mode = #tpu.pipeline_mode<synchronous>, transform_indices = @transform_10, window_bounds = array<i64: 1, 128>}, {pipeline_mode = #tpu.pipeline_mode<synchronous>, transform_indices = @transform_11, window_bounds = array<i64: 1, 128>}]} {
    %c0_i32 = arith.constant 0 : i32
    %0 = arith.cmpi eq, %arg0, %c0_i32 : i32
    %1 = arith.extui %0 : i1 to i32
    %c0_i32_0 = arith.constant 0 : i32
    %2 = arith.cmpi ne, %1, %c0_i32_0 : i32
    scf.if %2 {
      %cst_19 = arith.constant 0.000000e+00 : f32
      %51 = vector.broadcast %cst_19 : f32 to vector<1x1xf32>
      %c0_20 = arith.constant 0 : index
      %c0_21 = arith.constant 0 : index
      %52 = vector.load %arg14[%c0_20, %c0_21] : memref<1x1xf32, #tpu.memory_space<vmem>>, vector<1x1xf32>
      tpu.vector_store %arg14[%c0_20, %c0_21], %51 {strides = array<i32>} : memref<1x1xf32, #tpu.memory_space<vmem>>, vector<1x1xf32>,
    } else {
    }
    %c0 = arith.constant 0 : index
    %c0_1 = arith.constant 0 : index
    %3 = vector.load %arg2[%c0, %c0_1] : memref<8x128xf32, #tpu.memory_space<vmem>>, vector<8x128xf32>
    %c0_2 = arith.constant 0 : index
    %c0_3 = arith.constant 0 : index
    %4 = vector.load %arg3[%c0_2, %c0_3] : memref<8x128xf32, #tpu.memory_space<vmem>>, vector<8x128xf32>
    %5 = math.absf %3 : vector<8x128xf32>
    %cst = arith.constant 0.000000e+00 : f32
    %6 = vector.broadcast %cst : f32 to vector<8x128xf32>
    %7 = arith.subf %6, %5 : vector<8x128xf32>
    %8 = math.exp %7 : vector<8x128xf32>
    %cst_4 = arith.constant 1.000000e+00 : f32
    %9 = vector.broadcast %cst_4 : f32 to vector<8x128xf32>
    %10 = arith.addf %9, %8 : vector<8x128xf32>
    %11 = math.log %10 : vector<8x128xf32>
    %cst_5 = arith.constant 0.000000e+00 : f32
    %12 = vector.broadcast %cst_5 : f32 to vector<8x128xf32>
    %13 = arith.minimumf %3, %12 : vector<8x128xf32>
    %14 = arith.subf %13, %11 : vector<8x128xf32>
    %15 = arith.subf %14, %3 : vector<8x128xf32>
    %cst_6 = arith.constant 1.000000e+00 : f32
    %16 = vector.broadcast %cst_6 : f32 to vector<8x128xf32>
    %17 = arith.addf %16, %8 : vector<8x128xf32>
    %18 = tpu.reciprocal %17 {approx = true} : vector<8x128xf32> -> vector<8x128xf32>
    %cst_7 = arith.constant 0.000000e+00 : f32
    %19 = vector.broadcast %cst_7 : f32 to vector<8x128xf32>
    %20 = arith.cmpf oge, %3, %19 : vector<8x128xf32>
    %21 = arith.mulf %8, %18 : vector<8x128xf32>
    %22 = arith.select %20, %18, %21 : vector<8x128xi1>, vector<8x128xf32>
    %cst_8 = arith.constant 1.000000e+00 : f32
    %23 = vector.broadcast %cst_8 : f32 to vector<8x128xf32>
    %24 = arith.subf %23, %22 : vector<8x128xf32>
    %25 = arith.mulf %24, %24 : vector<8x128xf32>
    %cst_9 = arith.constant 2.500000e-01 : f32
    %26 = vector.broadcast %cst_9 : f32 to vector<8x128xf32>
    %27 = arith.mulf %26, %25 : vector<8x128xf32>
    %28 = arith.mulf %27, %4 : vector<8x128xf32>
    %29 = arith.mulf %28, %14 : vector<8x128xf32>
    %30 = arith.mulf %22, %22 : vector<8x128xf32>
    %cst_10 = arith.constant 7.500000e-01 : f32
    %31 = vector.broadcast %cst_10 : f32 to vector<8x128xf32>
    %32 = arith.mulf %31, %30 : vector<8x128xf32>
    %cst_11 = arith.constant 1.000000e+00 : f32
    %33 = vector.broadcast %cst_11 : f32 to vector<8x128xf32>
    %34 = arith.subf %33, %4 : vector<8x128xf32>
    %35 = arith.mulf %32, %34 : vector<8x128xf32>
    %36 = arith.mulf %35, %15 : vector<8x128xf32>
    %37 = arith.addf %29, %36 : vector<8x128xf32>
    %cst_12 = arith.constant 0.000000e+00 : f32
    %38 = vector.broadcast %cst_12 : f32 to vector<8x128xf32>
    %39 = arith.subf %38, %37 : vector<8x128xf32>
    %c0_13 = arith.constant 0 : index
    %c0_14 = arith.constant 0 : index
    %40 = vector.load %arg14[%c0_13, %c0_14] : memref<1x1xf32, #tpu.memory_space<vmem>>, vector<1x1xf32>
    %41 = vector.shape_cast %39 : vector<8x128xf32> to vector<1x8x128xf32>
    %cst_15 = arith.constant dense<0.000000e+00> : vector<1xf32>
    %42 = vector.multi_reduction <add>, %41, %cst_15 [1, 2] : vector<1x8x128xf32> to vector<1xf32>
    %43 = vector.shape_cast %42 : vector<1xf32> to vector<1x1x1xf32>
    %44 = vector.extract %43[0, 0, 0] : f32 from vector<1x1x1xf32>
    %45 = vector.broadcast %44 : f32 to vector<1x1xf32>
    %46 = arith.addf %40, %45 : vector<1x1xf32>
    %c0_16 = arith.constant 0 : index
    %c0_17 = arith.constant 0 : index
    %47 = vector.load %arg14[%c0_16, %c0_17] : memref<1x1xf32, #tpu.memory_space<vmem>>, vector<1x1xf32>
    tpu.vector_store %arg14[%c0_16, %c0_17], %46 {strides = array<i32>} : memref<1x1xf32, #tpu.memory_space<vmem>>, vector<1x1xf32>,
    %c1_i32 = arith.constant 1 : i32
    %48 = arith.cmpi eq, %arg0, %c1_i32 : i32
    %49 = arith.extui %48 : i1 to i32
    %c0_i32_18 = arith.constant 0 : i32
    %50 = arith.cmpi ne, %49, %c0_i32_18 : i32
    scf.if %50 {
      %c0_19 = arith.constant 0 : index
      %c0_20 = arith.constant 0 : index
      %c0_21 = arith.constant 0 : index
      %51 = vector.load %arg4[%c0_19, %c0_20, %c0_21] : memref<4x1x128xf32, #tpu.memory_space<vmem>>, vector<1x1x128xf32>
      %52 = vector.shape_cast %51 : vector<1x1x128xf32> to vector<1x128xf32>
      %c1 = arith.constant 1 : index
      %c0_22 = arith.constant 0 : index
      %c0_23 = arith.constant 0 : index
      %53 = vector.load %arg4[%c1, %c0_22, %c0_23] : memref<4x1x128xf32, #tpu.memory_space<vmem>>, vector<1x1x128xf32>
      %54 = vector.shape_cast %53 : vector<1x1x128xf32> to vector<1x128xf32>
      %c2 = arith.constant 2 : index
      %c0_24 = arith.constant 0 : index
      %c0_25 = arith.constant 0 : index
      %55 = vector.load %arg4[%c2, %c0_24, %c0_25] : memref<4x1x128xf32, #tpu.memory_space<vmem>>, vector<1x1x128xf32>
      %56 = vector.shape_cast %55 : vector<1x1x128xf32> to vector<1x128xf32>
      %c3 = arith.constant 3 : index
      %c0_26 = arith.constant 0 : index
      %c0_27 = arith.constant 0 : index
      %57 = vector.load %arg4[%c3, %c0_26, %c0_27] : memref<4x1x128xf32, #tpu.memory_space<vmem>>, vector<1x1x128xf32>
      %58 = vector.shape_cast %57 : vector<1x1x128xf32> to vector<1x128xf32>
      %c0_28 = arith.constant 0 : index
      %c0_29 = arith.constant 0 : index
      %c0_30 = arith.constant 0 : index
      %59 = vector.load %arg5[%c0_28, %c0_29, %c0_30] : memref<4x1x128xf32, #tpu.memory_space<vmem>>, vector<1x1x128xf32>
      %60 = vector.shape_cast %59 : vector<1x1x128xf32> to vector<1x128xf32>
      %c1_31 = arith.constant 1 : index
      %c0_32 = arith.constant 0 : index
      %c0_33 = arith.constant 0 : index
      %61 = vector.load %arg5[%c1_31, %c0_32, %c0_33] : memref<4x1x128xf32, #tpu.memory_space<vmem>>, vector<1x1x128xf32>
      %62 = vector.shape_cast %61 : vector<1x1x128xf32> to vector<1x128xf32>
      %c2_34 = arith.constant 2 : index
      %c0_35 = arith.constant 0 : index
      %c0_36 = arith.constant 0 : index
      %63 = vector.load %arg5[%c2_34, %c0_35, %c0_36] : memref<4x1x128xf32, #tpu.memory_space<vmem>>, vector<1x1x128xf32>
      %64 = vector.shape_cast %63 : vector<1x1x128xf32> to vector<1x128xf32>
      %c3_37 = arith.constant 3 : index
      %c0_38 = arith.constant 0 : index
      %c0_39 = arith.constant 0 : index
      %65 = vector.load %arg5[%c3_37, %c0_38, %c0_39] : memref<4x1x128xf32, #tpu.memory_space<vmem>>, vector<1x1x128xf32>
      %66 = vector.shape_cast %65 : vector<1x1x128xf32> to vector<1x128xf32>
      %c0_40 = arith.constant 0 : index
      %c0_41 = arith.constant 0 : index
      %67 = vector.load %arg6[%c0_40, %c0_41] : memref<1x128xf32, #tpu.memory_space<vmem>>, vector<1x128xf32>
      %68 = arith.subf %56, %52 : vector<1x128xf32>
      %69 = arith.subf %58, %54 : vector<1x128xf32>
      %70 = arith.mulf %68, %69 : vector<1x128xf32>
      %71 = arith.subf %64, %60 : vector<1x128xf32>
      %72 = arith.subf %66, %62 : vector<1x128xf32>
      %73 = arith.mulf %71, %72 : vector<1x128xf32>
      %74 = arith.minimumf %56, %64 : vector<1x128xf32>
      %75 = arith.maximumf %52, %60 : vector<1x128xf32>
      %76 = arith.subf %74, %75 : vector<1x128xf32>
      %cst_42 = arith.constant 0.000000e+00 : f32
      %77 = vector.broadcast %cst_42 : f32 to vector<1x128xf32>
      %78 = arith.maximumf %76, %77 : vector<1x128xf32>
      %79 = arith.minimumf %58, %66 : vector<1x128xf32>
      %80 = arith.maximumf %54, %62 : vector<1x128xf32>
      %81 = arith.subf %79, %80 : vector<1x128xf32>
      %cst_43 = arith.constant 0.000000e+00 : f32
      %82 = vector.broadcast %cst_43 : f32 to vector<1x128xf32>
      %83 = arith.maximumf %81, %82 : vector<1x128xf32>
      %84 = arith.mulf %78, %83 : vector<1x128xf32>
      %85 = arith.addf %70, %73 : vector<1x128xf32>
      %86 = arith.subf %85, %84 : vector<1x128xf32>
      %cst_44 = arith.constant 9.99999997E-7 : f32
      %87 = vector.broadcast %cst_44 : f32 to vector<1x128xf32>
      %88 = arith.addf %86, %87 : vector<1x128xf32>
      %89 = arith.divf %84, %88 : vector<1x128xf32>
      %90 = arith.maximumf %56, %64 : vector<1x128xf32>
      %91 = arith.minimumf %52, %60 : vector<1x128xf32>
      %92 = arith.subf %90, %91 : vector<1x128xf32>
      %93 = arith.maximumf %58, %66 : vector<1x128xf32>
      %94 = arith.minimumf %54, %62 : vector<1x128xf32>
      %95 = arith.subf %93, %94 : vector<1x128xf32>
      %96 = arith.mulf %92, %95 : vector<1x128xf32>
      %cst_45 = arith.constant 9.99999997E-7 : f32
      %97 = vector.broadcast %cst_45 : f32 to vector<1x128xf32>
      %98 = arith.addf %96, %97 : vector<1x128xf32>
      %99 = arith.subf %98, %88 : vector<1x128xf32>
      %100 = arith.divf %99, %98 : vector<1x128xf32>
      %101 = arith.subf %89, %100 : vector<1x128xf32>
      %cst_46 = arith.constant 1.000000e+00 : f32
      %102 = vector.broadcast %cst_46 : f32 to vector<1x128xf32>
      %103 = arith.subf %102, %101 : vector<1x128xf32>
      %104 = arith.mulf %103, %67 : vector<1x128xf32>
      %105 = vector.shape_cast %104 : vector<1x128xf32> to vector<1x1x128xf32>
      %cst_47 = arith.constant dense<0.000000e+00> : vector<1xf32>
      %106 = vector.multi_reduction <add>, %105, %cst_47 [1, 2] : vector<1x1x128xf32> to vector<1xf32>
      %107 = vector.shape_cast %106 : vector<1xf32> to vector<1x1x1xf32>
      %108 = vector.extract %107[0, 0, 0] : f32 from vector<1x1x1xf32>
      %109 = vector.broadcast %108 : f32 to vector<1x1xf32>
      %c0_48 = arith.constant 0 : index
      %c0_49 = arith.constant 0 : index
      %110 = vector.load %arg7[%c0_48, %c0_49] : memref<1x128xf32, #tpu.memory_space<vmem>>, vector<1x128xf32>
      %c0_50 = arith.constant 0 : index
      %c0_51 = arith.constant 0 : index
      %111 = vector.load %arg8[%c0_50, %c0_51] : memref<1x128xf32, #tpu.memory_space<vmem>>, vector<1x128xf32>
      %112 = arith.subf %110, %111 : vector<1x128xf32>
      %113 = math.absf %112 : vector<1x128xf32>
      %cst_52 = arith.constant 1.000000e+00 : f32
      %114 = vector.broadcast %cst_52 : f32 to vector<1x128xf32>
      %115 = arith.cmpf olt, %113, %114 : vector<1x128xf32>
      %cst_53 = arith.constant 5.000000e-01 : f32
      %116 = vector.broadcast %cst_53 : f32 to vector<1x128xf32>
      %117 = arith.mulf %116, %113 : vector<1x128xf32>
      %118 = arith.mulf %117, %113 : vector<1x128xf32>
      %cst_54 = arith.constant 1.000000e+00 : f32
      %119 = vector.broadcast %cst_54 : f32 to vector<1x128xf32>
      %120 = arith.divf %118, %119 : vector<1x128xf32>
      %cst_55 = arith.constant 5.000000e-01 : f32
      %121 = vector.broadcast %cst_55 : f32 to vector<1x128xf32>
      %122 = arith.subf %113, %121 : vector<1x128xf32>
      %123 = arith.select %115, %120, %122 : vector<1x128xi1>, vector<1x128xf32>
      %c0_56 = arith.constant 0 : index
      %c0_57 = arith.constant 0 : index
      %124 = vector.load %arg9[%c0_56, %c0_57] : memref<1x128xf32, #tpu.memory_space<vmem>>, vector<1x128xf32>
      %125 = arith.mulf %123, %124 : vector<1x128xf32>
      %126 = vector.shape_cast %125 : vector<1x128xf32> to vector<1x1x128xf32>
      %cst_58 = arith.constant dense<0.000000e+00> : vector<1xf32>
      %127 = vector.multi_reduction <add>, %126, %cst_58 [1, 2] : vector<1x1x128xf32> to vector<1xf32>
      %128 = vector.shape_cast %127 : vector<1xf32> to vector<1x1x1xf32>
      %129 = vector.extract %128[0, 0, 0] : f32 from vector<1x1x1xf32>
      %130 = vector.broadcast %129 : f32 to vector<1x1xf32>
      %c0_59 = arith.constant 0 : index
      %c0_60 = arith.constant 0 : index
      %131 = vector.load %arg10[%c0_59, %c0_60] : memref<1x128xf32, #tpu.memory_space<vmem>>, vector<1x128xf32>
      %c0_61 = arith.constant 0 : index
      %c0_62 = arith.constant 0 : index
      %132 = vector.load %arg11[%c0_61, %c0_62] : memref<1x128xf32, #tpu.memory_space<vmem>>, vector<1x128xf32>
      %cst_63 = arith.constant 0.000000e+00 : f32
      %133 = vector.broadcast %cst_63 : f32 to vector<1x128xf32>
      %134 = arith.maximumf %131, %133 : vector<1x128xf32>
      %135 = arith.mulf %131, %132 : vector<1x128xf32>
      %136 = arith.subf %134, %135 : vector<1x128xf32>
      %137 = math.absf %131 : vector<1x128xf32>
      %cst_64 = arith.constant 0.000000e+00 : f32
      %138 = vector.broadcast %cst_64 : f32 to vector<1x128xf32>
      %139 = arith.subf %138, %137 : vector<1x128xf32>
      %140 = math.exp %139 : vector<1x128xf32>
      %cst_65 = arith.constant 1.000000e+00 : f32
      %141 = vector.broadcast %cst_65 : f32 to vector<1x128xf32>
      %142 = arith.addf %141, %140 : vector<1x128xf32>
      %143 = math.log %142 : vector<1x128xf32>
      %144 = arith.addf %136, %143 : vector<1x128xf32>
      %c0_66 = arith.constant 0 : index
      %c0_67 = arith.constant 0 : index
      %145 = vector.load %arg12[%c0_66, %c0_67] : memref<1x128xf32, #tpu.memory_space<vmem>>, vector<1x128xf32>
      %146 = arith.mulf %144, %145 : vector<1x128xf32>
      %147 = vector.shape_cast %146 : vector<1x128xf32> to vector<1x1x128xf32>
      %cst_68 = arith.constant dense<0.000000e+00> : vector<1xf32>
      %148 = vector.multi_reduction <add>, %147, %cst_68 [1, 2] : vector<1x1x128xf32> to vector<1xf32>
      %149 = vector.shape_cast %148 : vector<1xf32> to vector<1x1x1xf32>
      %150 = vector.extract %149[0, 0, 0] : f32 from vector<1x1x1xf32>
      %151 = vector.broadcast %150 : f32 to vector<1x1xf32>
      %c0_69 = arith.constant 0 : index
      %c0_70 = arith.constant 0 : index
      %152 = vector.load %arg14[%c0_69, %c0_70] : memref<1x1xf32, #tpu.memory_space<vmem>>, vector<1x1xf32>
      %c0_71 = arith.constant 0 : index
      %153 = memref.load %arg1[%c0_71] : memref<4xf32, #tpu.memory_space<smem>>
      %154 = vector.broadcast %153 : f32 to vector<1x1xf32>
      %155 = arith.mulf %152, %154 : vector<1x1xf32>
      %c1_72 = arith.constant 1 : index
      %156 = memref.load %arg1[%c1_72] : memref<4xf32, #tpu.memory_space<smem>>
      %157 = vector.broadcast %156 : f32 to vector<1x1xf32>
      %158 = arith.mulf %109, %157 : vector<1x1xf32>
      %c2_73 = arith.constant 2 : index
      %159 = memref.load %arg1[%c2_73] : memref<4xf32, #tpu.memory_space<smem>>
      %160 = vector.broadcast %159 : f32 to vector<1x1xf32>
      %161 = arith.mulf %130, %160 : vector<1x1xf32>
      %c3_74 = arith.constant 3 : index
      %162 = memref.load %arg1[%c3_74] : memref<4xf32, #tpu.memory_space<smem>>
      %163 = vector.broadcast %162 : f32 to vector<1x1xf32>
      %164 = arith.mulf %151, %163 : vector<1x1xf32>
      %165 = tpu.iota {dimensions = array<i32: 1>} : vector<1x128xi32>
      %c0_i32_75 = arith.constant 0 : i32
      %166 = vector.broadcast %c0_i32_75 : i32 to vector<1x128xi32>
      %167 = arith.cmpi eq, %165, %166 : vector<1x128xi32>
      %cst_76 = arith.constant 0.000000e+00 : f32
      %168 = vector.shape_cast %155 : vector<1x1xf32> to vector<1x1xf32>
      %169 = vector.broadcast %168 : vector<1x1xf32> to vector<1x128xf32>
      %170 = vector.broadcast %cst_76 : f32 to vector<1x128xf32>
      %171 = arith.select %167, %169, %170 : vector<1x128xi1>, vector<1x128xf32>
      %c1_i32_77 = arith.constant 1 : i32
      %172 = vector.broadcast %c1_i32_77 : i32 to vector<1x128xi32>
      %173 = arith.cmpi eq, %165, %172 : vector<1x128xi32>
      %cst_78 = arith.constant 0.000000e+00 : f32
      %174 = vector.shape_cast %158 : vector<1x1xf32> to vector<1x1xf32>
      %175 = vector.broadcast %174 : vector<1x1xf32> to vector<1x128xf32>
      %176 = vector.broadcast %cst_78 : f32 to vector<1x128xf32>
      %177 = arith.select %173, %175, %176 : vector<1x128xi1>, vector<1x128xf32>
      %178 = arith.addf %171, %177 : vector<1x128xf32>
      %c2_i32 = arith.constant 2 : i32
      %179 = vector.broadcast %c2_i32 : i32 to vector<1x128xi32>
      %180 = arith.cmpi eq, %165, %179 : vector<1x128xi32>
      %cst_79 = arith.constant 0.000000e+00 : f32
      %181 = vector.shape_cast %161 : vector<1x1xf32> to vector<1x1xf32>
      %182 = vector.broadcast %181 : vector<1x1xf32> to vector<1x128xf32>
      %183 = vector.broadcast %cst_79 : f32 to vector<1x128xf32>
      %184 = arith.select %180, %182, %183 : vector<1x128xi1>, vector<1x128xf32>
      %185 = arith.addf %178, %184 : vector<1x128xf32>
      %c3_i32 = arith.constant 3 : i32
      %186 = vector.broadcast %c3_i32 : i32 to vector<1x128xi32>
      %187 = arith.cmpi eq, %165, %186 : vector<1x128xi32>
      %cst_80 = arith.constant 0.000000e+00 : f32
      %188 = vector.shape_cast %164 : vector<1x1xf32> to vector<1x1xf32>
      %189 = vector.broadcast %188 : vector<1x1xf32> to vector<1x128xf32>
      %190 = vector.broadcast %cst_80 : f32 to vector<1x128xf32>
      %191 = arith.select %187, %189, %190 : vector<1x128xi1>, vector<1x128xf32>
      %192 = arith.addf %185, %191 : vector<1x128xf32>
      %c0_81 = arith.constant 0 : index
      %c0_82 = arith.constant 0 : index
      %193 = vector.load %arg13[%c0_81, %c0_82] : memref<1x128xf32, #tpu.memory_space<vmem>>, vector<1x128xf32>
      tpu.vector_store %arg13[%c0_81, %c0_82], %192 {strides = array<i32>} : memref<1x128xf32, #tpu.memory_space<vmem>>, vector<1x128xf32>,
    } else {
    }
    return
  }
  func.func @transform_0(%arg0: i32, %arg1: memref<4xf32, #tpu.memory_space<smem>>) -> (i32, i32) {
    %c0_i32 = arith.constant 0 : i32
    %c0_i32_0 = arith.constant 0 : i32
    return %arg0, %c0_i32 : i32, i32
  }
  func.func @transform_1(%arg0: i32, %arg1: memref<4xf32, #tpu.memory_space<smem>>) -> (i32, i32) {
    %c0_i32 = arith.constant 0 : i32
    %c0_i32_0 = arith.constant 0 : i32
    return %arg0, %c0_i32 : i32, i32
  }
  func.func @transform_2(%arg0: i32, %arg1: memref<4xf32, #tpu.memory_space<smem>>) -> (i32, i32, i32) {
    %c0_i32 = arith.constant 0 : i32
    %c0_i32_0 = arith.constant 0 : i32
    %c0_i32_1 = arith.constant 0 : i32
    %c0_i32_2 = arith.constant 0 : i32
    return %c0_i32, %c0_i32_0, %c0_i32_1 : i32, i32, i32
  }
  func.func @transform_3(%arg0: i32, %arg1: memref<4xf32, #tpu.memory_space<smem>>) -> (i32, i32, i32) {
    %c0_i32 = arith.constant 0 : i32
    %c0_i32_0 = arith.constant 0 : i32
    %c0_i32_1 = arith.constant 0 : i32
    %c0_i32_2 = arith.constant 0 : i32
    return %c0_i32, %c0_i32_0, %c0_i32_1 : i32, i32, i32
  }
  func.func @transform_4(%arg0: i32, %arg1: memref<4xf32, #tpu.memory_space<smem>>) -> (i32, i32) {
    %c0_i32 = arith.constant 0 : i32
    %c0_i32_0 = arith.constant 0 : i32
    %c0_i32_1 = arith.constant 0 : i32
    return %c0_i32, %c0_i32_0 : i32, i32
  }
  func.func @transform_5(%arg0: i32, %arg1: memref<4xf32, #tpu.memory_space<smem>>) -> (i32, i32) {
    %c0_i32 = arith.constant 0 : i32
    %c0_i32_0 = arith.constant 0 : i32
    %c0_i32_1 = arith.constant 0 : i32
    return %c0_i32, %c0_i32_0 : i32, i32
  }
  func.func @transform_6(%arg0: i32, %arg1: memref<4xf32, #tpu.memory_space<smem>>) -> (i32, i32) {
    %c0_i32 = arith.constant 0 : i32
    %c0_i32_0 = arith.constant 0 : i32
    %c0_i32_1 = arith.constant 0 : i32
    return %c0_i32, %c0_i32_0 : i32, i32
  }
  func.func @transform_7(%arg0: i32, %arg1: memref<4xf32, #tpu.memory_space<smem>>) -> (i32, i32) {
    %c0_i32 = arith.constant 0 : i32
    %c0_i32_0 = arith.constant 0 : i32
    %c0_i32_1 = arith.constant 0 : i32
    return %c0_i32, %c0_i32_0 : i32, i32
  }
  func.func @transform_8(%arg0: i32, %arg1: memref<4xf32, #tpu.memory_space<smem>>) -> (i32, i32) {
    %c0_i32 = arith.constant 0 : i32
    %c0_i32_0 = arith.constant 0 : i32
    %c0_i32_1 = arith.constant 0 : i32
    return %c0_i32, %c0_i32_0 : i32, i32
  }
  func.func @transform_9(%arg0: i32, %arg1: memref<4xf32, #tpu.memory_space<smem>>) -> (i32, i32) {
    %c0_i32 = arith.constant 0 : i32
    %c0_i32_0 = arith.constant 0 : i32
    %c0_i32_1 = arith.constant 0 : i32
    return %c0_i32, %c0_i32_0 : i32, i32
  }
  func.func @transform_10(%arg0: i32, %arg1: memref<4xf32, #tpu.memory_space<smem>>) -> (i32, i32) {
    %c0_i32 = arith.constant 0 : i32
    %c0_i32_0 = arith.constant 0 : i32
    %c0_i32_1 = arith.constant 0 : i32
    return %c0_i32, %c0_i32_0 : i32, i32
  }
  func.func @transform_11(%arg0: i32, %arg1: memref<4xf32, #tpu.memory_space<smem>>) -> (i32, i32) {
    %c0_i32 = arith.constant 0 : i32
    %c0_i32_0 = arith.constant 0 : i32
    %c0_i32_1 = arith.constant 0 : i32
    return %c0_i32, %c0_i32_0 : i32, i32
  }
}

</mosaic_0001>

<llo_original>
// kernel: vehicle_side_fcos_losses.1
$region0: #{vehicle_side_fcos_losses.1}
  #allocation0 [shape = 'u32[]', space=smem, size = 0x4, offset = 0x4, fixed_abs, tag = 'smem constant byte address 0x4 - core index']
  #allocation1 [shape = 'u32[72,128]{1,0:T(1,128)}', space=vmem, size = 0x9000, scoped, tag = 'internal scratch']
  #allocation2 [shape = 'f32[1,1]{1,0:T(1,128)}', space=vmem, size = 0x200, scoped, tag = 'scratch operand']
  #allocation3 [shape = 's32[1]{0}', space=sflag, size = 0x4, scoped, tag = 'scoped memory for vehicle_side_fcos_losses.1']
  #allocation4 [shape = 'u8[512]{0}', space=smem, size = 0x200, scoped, tag = 'prefetched SMEM operand 0']
  %s0 = inlined_call_operand.vmem [shape: f32[4], index: 0, kind: input, shape index: {}]
  %s1 = inlined_call_operand.vmem [shape: f32[16,128], index: 1, kind: input, shape index: {}]
  %s2 = inlined_call_operand.vmem [shape: f32[16,128], index: 2, kind: input, shape index: {}]
  %s3 = inlined_call_operand.vmem [shape: f32[4,1,128], index: 3, kind: input, shape index: {}]
  %s4 = inlined_call_operand.vmem [shape: f32[4,1,128], index: 4, kind: input, shape index: {}]
  %s5 = inlined_call_operand.vmem [shape: f32[1,128], index: 5, kind: input, shape index: {}]
  %s6 = inlined_call_operand.vmem [shape: f32[1,128], index: 6, kind: input, shape index: {}]
  %s7 = inlined_call_operand.vmem [shape: f32[1,128], index: 7, kind: input, shape index: {}]
  %s8 = inlined_call_operand.vmem [shape: f32[1,128], index: 8, kind: input, shape index: {}]
  %s9 = inlined_call_operand.vmem [shape: f32[1,128], index: 9, kind: input, shape index: {}]
  %s10 = inlined_call_operand.vmem [shape: f32[1,128], index: 10, kind: input, shape index: {}]
  %s11 = inlined_call_operand.vmem [shape: f32[1,128], index: 11, kind: input, shape index: {}]
  %s12 = inlined_call_operand.hbm [shape: f32[1,128], index: 12, kind: output, shape index: {}]
  %s13 = sld [smem:[#allocation0]]
  $region85: #{vehicle_side_fcos_losses.1} parent=0
    _
  %s15 = ssub.s32 1, %s13
  %s16 = scalar_select 0, %s15, %s13
  %s18 = sshll.u32 %s0, 4
  %s19 = int_to_ptr.vmem [resolvable:$true] %s18
  %21 = dma.vmem_to_smem %s19, 16, [#allocation4], [#allocation3]
  %23 = dma.done [#allocation3], 16
  %24 = sfence
  $region1: #{vehicle_side_fcos_losses.1} parent=0
    #allocation5 [shape = 'u8[512]{0}', space=vmem, size = 0x400, scoped, tag = 'output window, operand 0, single buffered']
    #allocation6 [shape = 's32[2]{0}', space=sflag, size = 0x8, scoped, tag = 'scoped memory for vehicle_side_fcos_losses.1']
    %25 = vsyncpa [#allocation6], 0
    loop: start=0, step=1, limit=4
    $region2: #{vehicle_side_fcos_losses.1} parent=1 // loop_pre_header
      _
    $region3: #{vehicle_side_fcos_losses.1} parent=1 // loop_header
      %s27 = sphi 0, %s31
      %p28 = scmp.ge.s32.totalorder %s27, 4
      %s37 = sphi 0, %s39
      %s40 = sphi 0, %s37
      %s41 = sphi 0, %s40
      %s57 = sphi 0, %s41
      %s63 = sphi 0, %s65
      %s66 = sphi 0, %s63
      %s67 = sphi 0, %s66
      %s83 = sphi 0, %s67
      %s87 = sphi 0, %s87
      %s89 = sphi 0, %s87
      %s90 = sphi 0, %s89
      %s104 = sphi 0, %s90
      %s108 = sphi 0, %s108
      %s110 = sphi 0, %s108
      %s111 = sphi 0, %s110
      %s125 = sphi 0, %s111
      %s129 = sphi 0, %s129
      %s131 = sphi 0, %s129
      %s132 = sphi 0, %s131
      %s146 = sphi 0, %s132
      %s150 = sphi 0, %s150
      %s152 = sphi 0, %s150
      %s153 = sphi 0, %s152
      %s167 = sphi 0, %s153
      %s171 = sphi 0, %s171
      %s173 = sphi 0, %s171
      %s174 = sphi 0, %s173
      %s188 = sphi 0, %s174
      %s192 = sphi 0, %s192
      %s194 = sphi 0, %s192
      %s195 = sphi 0, %s194
      %s209 = sphi 0, %s195
      %s213 = sphi 0, %s213
      %s215 = sphi 0, %s213
      %s216 = sphi 0, %s215
      %s230 = sphi 0, %s216
      %s234 = sphi 0, %s234
      %s236 = sphi 0, %s234
      %s237 = sphi 0, %s236
      %s251 = sphi 0, %s237
      %s255 = sphi 0, %s255
      %s257 = sphi 0, %s255
      %s258 = sphi 0, %s257
      %s272 = sphi 0, %s258
      %s276 = sphi 0, %s276
      %s278 = sphi 0, %s276
      %s279 = sphi 0, %s278
      %s293 = sphi 0, %s279
    $region4: #{vehicle_side_fcos_losses.1} parent=1 // loop_header_branch
      %30 = sbr.rel (%p28) target = $region8
    $region5: #{vehicle_side_fcos_losses.1} parent=1 // loop_body
      %s32 = ssub.s32 %s27, 1
      %s33 = ssub.s32 %s27, 2
      %s34 = sadd.s32 %s27, 1
      %s35 = ssub.s32 %s27, %s34
      %p36 = scmp.eq.s32.totalorder %s35, 0
      %s38 = sadd.s32 %s37, 1
      %s39 = scalar_select %p36, %s37, %s38
      %p42 = pneg %p36
      %p43 = scmp.eq.s32.totalorder %s27, 1
      %p44 = por %p42, %p43
      %p45 = scmp.ne.s32.totalorder %s37, %s40
      %p46 = scmp.eq.s32.totalorder %s27, 0
      %p47 = por %p45, %p46
      %p48 = scmp.ne.s32.totalorder %s37, %s40
      %p49 = scmp.eq.s32.totalorder %s32, 1
      %p50 = por %p48, %p49
      %p51 = scmp.ne.s32.totalorder %s40, %s41
      %p52 = scmp.eq.s32.totalorder %s32, 0
      %p53 = por %p51, %p52
      %p54 = scmp.ne.s32.totalorder %s40, %s41
      %p55 = scmp.eq.s32.totalorder %s33, 1
      %p56 = por %p54, %p55
      %p58 = scmp.ne.s32.totalorder %s41, %s57
      %p59 = scmp.eq.s32.totalorder %s33, 0
      %p60 = por %p58, %p59
      %s61 = ssub.s32 %s27, %s34
      %p62 = scmp.eq.s32.totalorder %s61, 0
      %s64 = sadd.s32 %s63, 1
      %s65 = scalar_select %p62, %s63, %s64
      %p68 = pneg %p62
      %p69 = scmp.eq.s32.totalorder %s27, 1
      %p70 = por %p68, %p69
      %p71 = scmp.ne.s32.totalorder %s63, %s66
      %p72 = scmp.eq.s32.totalorder %s27, 0
      %p73 = por %p71, %p72
      %p74 = scmp.ne.s32.totalorder %s63, %s66
      %p75 = scmp.eq.s32.totalorder %s32, 1
      %p76 = por %p74, %p75
      %p77 = scmp.ne.s32.totalorder %s66, %s67
      %p78 = scmp.eq.s32.totalorder %s32, 0
      %p79 = por %p77, %p78
      %p80 = scmp.ne.s32.totalorder %s66, %s67
      %p81 = scmp.eq.s32.totalorder %s33, 1
      %p82 = por %p80, %p81
      %p84 = scmp.ne.s32.totalorder %s67, %s83
      %p85 = scmp.eq.s32.totalorder %s33, 0
      %p86 = por %p84, %p85
      %s88 = sadd.s32 %s87, 1
      %p91 = scmp.eq.s32.totalorder %s27, 1
      %p92 = scmp.ne.s32.totalorder %s87, %s89
      %p93 = scmp.eq.s32.totalorder %s27, 0
      %p94 = por %p92, %p93
      %p95 = scmp.ne.s32.totalorder %s87, %s89
      %p96 = scmp.eq.s32.totalorder %s32, 1
      %p97 = por %p95, %p96
      %p98 = scmp.ne.s32.totalorder %s89, %s90
      %p99 = scmp.eq.s32.totalorder %s32, 0
      %p100 = por %p98, %p99
      %p101 = scmp.ne.s32.totalorder %s89, %s90
      %p102 = scmp.eq.s32.totalorder %s33, 1
      %p103 = por %p101, %p102
      %p105 = scmp.ne.s32.totalorder %s90, %s104
      %p106 = scmp.eq.s32.totalorder %s33, 0
      %p107 = por %p105, %p106
      %s109 = sadd.s32 %s108, 1
      %p112 = scmp.eq.s32.totalorder %s27, 1
      %p113 = scmp.ne.s32.totalorder %s108, %s110
      %p114 = scmp.eq.s32.totalorder %s27, 0
      %p115 = por %p113, %p114
      %p116 = scmp.ne.s32.totalorder %s108, %s110
      %p117 = scmp.eq.s32.totalorder %s32, 1
      %p118 = por %p116, %p117
      %p119 = scmp.ne.s32.totalorder %s110, %s111
      %p120 = scmp.eq.s32.totalorder %s32, 0
      %p121 = por %p119, %p120
      %p122 = scmp.ne.s32.totalorder %s110, %s111
      %p123 = scmp.eq.s32.totalorder %s33, 1
      %p124 = por %p122, %p123
      %p126 = scmp.ne.s32.totalorder %s111, %s125
      %p127 = scmp.eq.s32.totalorder %s33, 0
      %p128 = por %p126, %p127
      %s130 = sadd.s32 %s129, 1
      %p133 = scmp.eq.s32.totalorder %s27, 1
      %p134 = scmp.ne.s32.totalorder %s129, %s131
      %p135 = scmp.eq.s32.totalorder %s27, 0
      %p136 = por %p134, %p135
      %p137 = scmp.ne.s32.totalorder %s129, %s131
      %p138 = scmp.eq.s32.totalorder %s32, 1
      %p139 = por %p137, %p138
      %p140 = scmp.ne.s32.totalorder %s131, %s132
      %p141 = scmp.eq.s32.totalorder %s32, 0
      %p142 = por %p140, %p141
      %p143 = scmp.ne.s32.totalorder %s131, %s132
      %p144 = scmp.eq.s32.totalorder %s33, 1
      %p145 = por %p143, %p144
      %p147 = scmp.ne.s32.totalorder %s132, %s146
      %p148 = scmp.eq.s32.totalorder %s33, 0
      %p149 = por %p147, %p148
      %s151 = sadd.s32 %s150, 1
      %p154 = scmp.eq.s32.totalorder %s27, 1
      %p155 = scmp.ne.s32.totalorder %s150, %s152
      %p156 = scmp.eq.s32.totalorder %s27, 0
      %p157 = por %p155, %p156
      %p158 = scmp.ne.s32.totalorder %s150, %s152
      %p159 = scmp.eq.s32.totalorder %s32, 1
      %p160 = por %p158, %p159
      %p161 = scmp.ne.s32.totalorder %s152, %s153
      %p162 = scmp.eq.s32.totalorder %s32, 0
      %p163 = por %p161, %p162
      %p164 = scmp.ne.s32.totalorder %s152, %s153
      %p165 = scmp.eq.s32.totalorder %s33, 1
      %p166 = por %p164, %p165
      %p168 = scmp.ne.s32.totalorder %s153, %s167
      %p169 = scmp.eq.s32.totalorder %s33, 0
      %p170 = por %p168, %p169
      %s172 = sadd.s32 %s171, 1
      %p175 = scmp.eq.s32.totalorder %s27, 1
      %p176 = scmp.ne.s32.totalorder %s171, %s173
      %p177 = scmp.eq.s32.totalorder %s27, 0
      %p178 = por %p176, %p177
      %p179 = scmp.ne.s32.totalorder %s171, %s173
      %p180 = scmp.eq.s32.totalorder %s32, 1
      %p181 = por %p179, %p180
      %p182 = scmp.ne.s32.totalorder %s173, %s174
      %p183 = scmp.eq.s32.totalorder %s32, 0
      %p184 = por %p182, %p183
      %p185 = scmp.ne.s32.totalorder %s173, %s174
      %p186 = scmp.eq.s32.totalorder %s33, 1
      %p187 = por %p185, %p186
      %p189 = scmp.ne.s32.totalorder %s174, %s188
      %p190 = scmp.eq.s32.totalorder %s33, 0
      %p191 = por %p189, %p190
      %s193 = sadd.s32 %s192, 1
      %p196 = scmp.eq.s32.totalorder %s27, 1
      %p197 = scmp.ne.s32.totalorder %s192, %s194
      %p198 = scmp.eq.s32.totalorder %s27, 0
      %p199 = por %p197, %p198
      %p200 = scmp.ne.s32.totalorder %s192, %s194
      %p201 = scmp.eq.s32.totalorder %s32, 1
      %p202 = por %p200, %p201
      %p203 = scmp.ne.s32.totalorder %s194, %s195
      %p204 = scmp.eq.s32.totalorder %s32, 0
      %p205 = por %p203, %p204
      %p206 = scmp.ne.s32.totalorder %s194, %s195
      %p207 = scmp.eq.s32.totalorder %s33, 1
      %p208 = por %p206, %p207
      %p210 = scmp.ne.s32.totalorder %s195, %s209
      %p211 = scmp.eq.s32.totalorder %s33, 0
      %p212 = por %p210, %p211
      %s214 = sadd.s32 %s213, 1
      %p217 = scmp.eq.s32.totalorder %s27, 1
      %p218 = scmp.ne.s32.totalorder %s213, %s215
      %p219 = scmp.eq.s32.totalorder %s27, 0
      %p220 = por %p218, %p219
      %p221 = scmp.ne.s32.totalorder %s213, %s215
      %p222 = scmp.eq.s32.totalorder %s32, 1
      %p223 = por %p221, %p222
      %p224 = scmp.ne.s32.totalorder %s215, %s216
      %p225 = scmp.eq.s32.totalorder %s32, 0
      %p226 = por %p224, %p225
      %p227 = scmp.ne.s32.totalorder %s215, %s216
      %p228 = scmp.eq.s32.totalorder %s33, 1
      %p229 = por %p227, %p228
      %p231 = scmp.ne.s32.totalorder %s216, %s230
      %p232 = scmp.eq.s32.totalorder %s33, 0
      %p233 = por %p231, %p232
      %s235 = sadd.s32 %s234, 1
      %p238 = scmp.eq.s32.totalorder %s27, 1
      %p239 = scmp.ne.s32.totalorder %s234, %s236
      %p240 = scmp.eq.s32.totalorder %s27, 0
      %p241 = por %p239, %p240
      %p242 = scmp.ne.s32.totalorder %s234, %s236
      %p243 = scmp.eq.s32.totalorder %s32, 1
      %p244 = por %p242, %p243
      %p245 = scmp.ne.s32.totalorder %s236, %s237
      %p246 = scmp.eq.s32.totalorder %s32, 0
      %p247 = por %p245, %p246
      %p248 = scmp.ne.s32.totalorder %s236, %s237
      %p249 = scmp.eq.s32.totalorder %s33, 1
      %p250 = por %p248, %p249
      %p252 = scmp.ne.s32.totalorder %s237, %s251
      %p253 = scmp.eq.s32.totalorder %s33, 0
      %p254 = por %p252, %p253
      %s256 = sadd.s32 %s255, 1
      %p259 = scmp.eq.s32.totalorder %s27, 1
      %p260 = scmp.ne.s32.totalorder %s255, %s257
      %p261 = scmp.eq.s32.totalorder %s27, 0
      %p262 = por %p260, %p261
      %p263 = scmp.ne.s32.totalorder %s255, %s257
      %p264 = scmp.eq.s32.totalorder %s32, 1
      %p265 = por %p263, %p264
      %p266 = scmp.ne.s32.totalorder %s257, %s258
      %p267 = scmp.eq.s32.totalorder %s32, 0
      %p268 = por %p266, %p267
      %p269 = scmp.ne.s32.totalorder %s257, %s258
      %p270 = scmp.eq.s32.totalorder %s33, 1
      %p271 = por %p269, %p270
      %p273 = scmp.ne.s32.totalorder %s258, %s272
      %p274 = scmp.eq.s32.totalorder %s33, 0
      %p275 = por %p273, %p274
      %s277 = sadd.s32 %s276, 1
      %p280 = scmp.eq.s32.totalorder %s27, 1
      %p281 = scmp.ne.s32.totalorder %s276, %s278
      %p282 = scmp.eq.s32.totalorder %s27, 0
      %p283 = por %p281, %p282
      %p284 = scmp.ne.s32.totalorder %s276, %s278
      %p285 = scmp.eq.s32.totalorder %s32, 1
      %p286 = por %p284, %p285
      %p287 = scmp.ne.s32.totalorder %s278, %s279
      %p288 = scmp.eq.s32.totalorder %s32, 0
      %p289 = por %p287, %p288
      %p290 = scmp.ne.s32.totalorder %s278, %s279
      %p291 = scmp.eq.s32.totalorder %s33, 1
      %p292 = por %p290, %p291
      %p294 = scmp.ne.s32.totalorder %s279, %s293
      %p295 = scmp.eq.s32.totalorder %s33, 0
      %p296 = por %p294, %p295
      %p297 = scmp.le.s32.totalorder 1, %s27
      %p298 = scmp.lt.s32.totalorder %s27, 3
      %p299 = pnand %p297, %p298
      %p300 = pneg %p299
      // Predicated region
      $region9: #{vehicle_side_fcos_losses.1} parent=5 // pred_check
        _
      $region10: #{vehicle_side_fcos_losses.1} parent=5 // pred_check_branch
        %302 = sbr.rel (%p299) target = $region12
      $region11: #{vehicle_side_fcos_losses.1} parent=5 // pred_region
        %s303 = ssub.s32 %s27, 1
        // Predicated region
        $region13: #{vehicle_side_fcos_losses.1} parent=11 // pred_check
          %p304 = pneg %p100
        $region14: #{vehicle_side_fcos_losses.1} parent=11 // pred_check_branch
          %306 = sbr.rel (%p304) target = $region16
        $region15: #{vehicle_side_fcos_losses.1} parent=11 // pred_region
          _
        $region16: #{vehicle_side_fcos_losses.1} parent=11 // pred_fallthru
          _
        // Predicated region
        $region17: #{vehicle_side_fcos_losses.1} parent=11 // pred_check
          %p307 = pneg %p121
        $region18: #{vehicle_side_fcos_losses.1} parent=11 // pred_check_branch
          %309 = sbr.rel (%p307) target = $region20
        $region19: #{vehicle_side_fcos_losses.1} parent=11 // pred_region
          _
        $region20: #{vehicle_side_fcos_losses.1} parent=11 // pred_fallthru
          _
        // Predicated region
        $region21: #{vehicle_side_fcos_losses.1} parent=11 // pred_check
          %p310 = pneg %p142
        $region22: #{vehicle_side_fcos_losses.1} parent=11 // pred_check_branch
          %312 = sbr.rel (%p310) target = $region24
        $region23: #{vehicle_side_fcos_losses.1} parent=11 // pred_region
          _
        $region24: #{vehicle_side_fcos_losses.1} parent=11 // pred_fallthru
          _
        // Predicated region
        $region25: #{vehicle_side_fcos_losses.1} parent=11 // pred_check
          %p313 = pneg %p163
        $region26: #{vehicle_side_fcos_losses.1} parent=11 // pred_check_branch
          %315 = sbr.rel (%p313) target = $region28
        $region27: #{vehicle_side_fcos_losses.1} parent=11 // pred_region
          _
        $region28: #{vehicle_side_fcos_losses.1} parent=11 // pred_fallthru
          _
        // Predicated region
        $region29: #{vehicle_side_fcos_losses.1} parent=11 // pred_check
          %p316 = pneg %p184
        $region30: #{vehicle_side_fcos_losses.1} parent=11 // pred_check_branch
          %318 = sbr.rel (%p316) target = $region32
        $region31: #{vehicle_side_fcos_losses.1} parent=11 // pred_region
          _
        $region32: #{vehicle_side_fcos_losses.1} parent=11 // pred_fallthru
          _
        // Predicated region
        $region33: #{vehicle_side_fcos_losses.1} parent=11 // pred_check
          %p319 = pneg %p205
        $region34: #{vehicle_side_fcos_losses.1} parent=11 // pred_check_branch
          %321 = sbr.rel (%p319) target = $region36
        $region35: #{vehicle_side_fcos_losses.1} parent=11 // pred_region
          _
        $region36: #{vehicle_side_fcos_losses.1} parent=11 // pred_fallthru
          _
        // Predicated region
        $region37: #{vehicle_side_fcos_losses.1} parent=11 // pred_check
          %p322 = pneg %p226
        $region38: #{vehicle_side_fcos_losses.1} parent=11 // pred_check_branch
          %324 = sbr.rel (%p322) target = $region40
        $region39: #{vehicle_side_fcos_losses.1} parent=11 // pred_region
          _
        $region40: #{vehicle_side_fcos_losses.1} parent=11 // pred_fallthru
          _
        // Predicated region
        $region41: #{vehicle_side_fcos_losses.1} parent=11 // pred_check
          %p325 = pneg %p247
        $region42: #{vehicle_side_fcos_losses.1} parent=11 // pred_check_branch
          %327 = sbr.rel (%p325) target = $region44
        $region43: #{vehicle_side_fcos_losses.1} parent=11 // pred_region
          _
        $region44: #{vehicle_side_fcos_losses.1} parent=11 // pred_fallthru
          _
        // Predicated region
        $region45: #{vehicle_side_fcos_losses.1} parent=11 // pred_check
          %p328 = pneg %p268
        $region46: #{vehicle_side_fcos_losses.1} parent=11 // pred_check_branch
          %330 = sbr.rel (%p328) target = $region48
        $region47: #{vehicle_side_fcos_losses.1} parent=11 // pred_region
          _
        $region48: #{vehicle_side_fcos_losses.1} parent=11 // pred_fallthru
          _
      $region12: #{vehicle_side_fcos_losses.1} parent=5 // pred_fallthru
        _
      %p331 = scmp.lt.s32.totalorder %s27, 2
      // Predicated region
      $region49: #{vehicle_side_fcos_losses.1} parent=5 // pred_check
        %p332 = pneg %p331
      $region50: #{vehicle_side_fcos_losses.1} parent=5 // pred_check_branch
        %334 = sbr.rel (%p332) target = $region52
      $region51: #{vehicle_side_fcos_losses.1} parent=5 // pred_region
        // Predicated region
        $region53: #{vehicle_side_fcos_losses.1} parent=51 // pred_check
          %p335 = pneg %p47
        $region54: #{vehicle_side_fcos_losses.1} parent=51 // pred_check_branch
          %337 = sbr.rel (%p335) target = $region56
        $region55: #{vehicle_side_fcos_losses.1} parent=51 // pred_region
          %p338 = scmp.lt.s32.totalorder %s27, 1
          %s339 = scalar_select %p338, %s27, 1
          %s340 = smul.addr %s339, 8
          %s341 = scalar_lea.vmem %s1, %s340
        $region56: #{vehicle_side_fcos_losses.1} parent=51 // pred_fallthru
          _
        // Predicated region
        $region57: #{vehicle_side_fcos_losses.1} parent=51 // pred_check
          %p342 = pneg %p73
        $region58: #{vehicle_side_fcos_losses.1} parent=51 // pred_check_branch
          %344 = sbr.rel (%p342) target = $region60
        $region59: #{vehicle_side_fcos_losses.1} parent=51 // pred_region
          %p345 = scmp.lt.s32.totalorder %s27, 1
          %s346 = scalar_select %p345, %s27, 1
          %s347 = smul.addr %s346, 8
          %s348 = scalar_lea.vmem %s2, %s347
        $region60: #{vehicle_side_fcos_losses.1} parent=51 // pred_fallthru
          _
      $region52: #{vehicle_side_fcos_losses.1} parent=5 // pred_fallthru
        _
      %p349 = scmp.le.s32.totalorder 1, %s27
      %p350 = scmp.lt.s32.totalorder %s27, 3
      %p351 = pnand %p349, %p350
      %p352 = pneg %p351
      // Predicated region
      $region61: #{vehicle_side_fcos_losses.1} parent=5 // pred_check
        _
      $region62: #{vehicle_side_fcos_losses.1} parent=5 // pred_check_branch
        %354 = sbr.rel (%p351) target = $region64
      $region63: #{vehicle_side_fcos_losses.1} parent=5 // pred_region
        %s355 = ssub.s32 %s27, 1
        %p356 = scmp.lt.s32.totalorder %s32, 1
        %s357 = scalar_select %p356, %s32, 1
        %s358 = smul.addr %s357, 8
        %s359 = scalar_lea.vmem %s1, %s358
        %p360 = pneg %p53
        %p361 = pneg %p50
        %p362 = scmp.lt.s32.totalorder %s32, 1
        %s363 = scalar_select %p362, %s32, 1
        %s364 = smul.addr %s363, 8
        %s365 = scalar_lea.vmem %s2, %s364
        %p366 = pneg %p79
        %p367 = pneg %p76
        %p368 = pneg %p100
        %p369 = pneg %p97
        %p370 = pneg %p121
        %p371 = pneg %p118
        %p372 = pneg %p142
        %p373 = pneg %p139
        %p374 = pneg %p163
        %p375 = pneg %p160
        %p376 = pneg %p184
        %p377 = pneg %p181
        %p378 = pneg %p205
        %p379 = pneg %p202
        %p380 = pneg %p226
        %p381 = pneg %p223
        %p382 = pneg %p247
        %p383 = pneg %p244
        %p384 = pneg %p268
        %p385 = pneg %p265
        %p386 = pneg %p289
        %p387 = pneg %p286
        %p388 = scmp.lt.s32.totalorder %s32, 1
        %s389 = scalar_select %p388, %s32, 1
        %s390 = smul.addr %s389, 8
        %s391 = scalar_lea.vmem %s1, %s390
        %p392 = scmp.lt.s32.totalorder %s32, 1
        %s393 = scalar_select %p392, %s32, 1
        %s394 = smul.addr %s393, 8
        %s395 = scalar_lea.vmem %s2, %s394
        %p396 = scmp.eq.s32.totalorder %s32, 0
        // Predicated region
        $region65: #{vehicle_side_fcos_losses.1} parent=63 // pred_check
          %p397 = pneg %p396
        $region66: #{vehicle_side_fcos_losses.1} parent=63 // pred_check_branch
          %399 = sbr.rel (%p397) target = $region68
        $region67: #{vehicle_side_fcos_losses.1} parent=63 // pred_region
          %vm400 = vcmask 0
          %401 = vst.msk [vmem:[#allocation2] sm:$0x1] %vm400, 0.0
        $region68: #{vehicle_side_fcos_losses.1} parent=63 // pred_fallthru
          _
        %v402 = vld [vmem:[%s391] sm:$0xff]
        %v403 = vld [vmem:[%s395] sm:$0xff]
        %v404 = vand.u32 2147483647, %v402
        %v405 = vsub.f32 0.0, %v404
        %v406 = vmul.f32 %v405, 1.442695
        %v407 = vpow.pop %v406
        %v408 = vadd.f32 %v407, 1.0
        %v409 = vlog2.pop %v408
        %v410 = vmul.f32 %v409, 0.6931472
        %v411 = vmin.f32 %v402, 0.0
        %v412 = vsub.f32 %v411, %v410
        %v413 = vsub.f32 %v412, %v402
        %v414 = vrcp.pop %v408
        %vm415 = vcmp.ge.f32.partialorder %v402, 0.0
        %v416 = vmul.f32 %v407, %v414
        %v417 = vsel %vm415, %v414, %v416
        %v418 = vsub.f32 1.0, %v417
        %v419 = vmul.f32 %v418, %v418
        %v420 = vmul.f32 %v419, 0.25
        %v421 = vmul.f32 %v420, %v403
        %v422 = vmul.f32 %v421, %v412
        %v423 = vmul.f32 %v417, %v417
        %v424 = vmul.f32 %v423, 0.75
        %v425 = vsub.f32 1.0, %v403
        %v426 = vmul.f32 %v424, %v425
        %v427 = vmul.f32 %v426, %v413
        %v428 = vadd.f32 %v422, %v427
        %v429 = vsub.f32 0.0, %v428
        %v430 = vld [vmem:[#allocation2] sm:$0x1]
        %431 = vadd.xlane.f32.xlu0 %v429
        %v432 = vpop.xlane.xlu0 %431
        %v433 = vrot.slane %v432, 4
        %v434 = vadd.f32 %v432, %v433
        %v435 = vrot.slane %v434, 2
        %v436 = vadd.f32 %v434, %v435
        %v437 = vrot.slane %v436, 1
        %v438 = vadd.f32 %v436, %v437
        %s439 = vtos %v438
        %v440 = vstv %s439
        %v441 = vadd.f32 %v430, %v440
        %vm442 = vcmask 0
        %443 = vst.msk [vmem:[#allocation2] sm:$0x1] %vm442, %v441
        %p444 = scmp.eq.s32.totalorder %s32, 1
        // Predicated region
        $region69: #{vehicle_side_fcos_losses.1} parent=63 // pred_check
          %p445 = pneg %p444
        $region70: #{vehicle_side_fcos_losses.1} parent=63 // pred_check_branch
          %447 = sbr.rel (%p445) target = $region72
        $region71: #{vehicle_side_fcos_losses.1} parent=63 // pred_region
          %v448 = vld [vmem:[%s3] sm:$0x1]
          %s449 = scalar_lea.vmem %s3, 1
          %v450 = vld [vmem:[%s449] sm:$0x1]
          %s451 = scalar_lea.vmem %s3, 2
          %v452 = vld [vmem:[%s451] sm:$0x1]
          %s453 = scalar_lea.vmem %s3, 3
          %v454 = vld [vmem:[%s453] sm:$0x1]
          %v455 = vld [vmem:[%s4] sm:$0x1]
          %s456 = scalar_lea.vmem %s4, 1
          %v457 = vld [vmem:[%s456] sm:$0x1]
          %s458 = scalar_lea.vmem %s4, 2
          %v459 = vld [vmem:[%s458] sm:$0x1]
          %s460 = scalar_lea.vmem %s4, 3
          %v461 = vld [vmem:[%s460] sm:$0x1]
          %v462 = vld [vmem:[%s5] sm:$0x1]
          %v463 = vsub.f32 %v452, %v448
          %v464 = vsub.f32 %v454, %v450
          %v465 = vmul.f32 %v463, %v464
          %v466 = vsub.f32 %v459, %v455
          %v467 = vsub.f32 %v461, %v457
          %v468 = vmul.f32 %v466, %v467
          %v469 = vmin.f32 %v452, %v459
          %v470 = vmax.f32 %v448, %v455
          %v471 = vsub.f32 %v469, %v470
          %v472 = vmax.f32 %v471, 0.0
          %v473 = vmin.f32 %v454, %v461
          %v474 = vmax.f32 %v450, %v457
          %v475 = vsub.f32 %v473, %v474
          %v476 = vmax.f32 %v475, 0.0
          %v477 = vmul.f32 %v472, %v476
          %v478 = vadd.f32 %v465, %v468
          %v479 = vsub.f32 %v478, %v477
          %v480 = vadd.f32 %v479, 1e-06
          %v481 = vrcp.pop %v480
          %v482 = vmul.f32 %v480, %v481
          %v483 = vsub.f32 1.0, %v482
          %v484 = vmul.f32 %v481, %v483
          %v485 = vadd.f32 %v481, %v484
          %vm486 = vweird.f32 %v480
          %vm487 = vweird.f32 %v481
          %vm488 = vmor %vm486, %vm487
          %v489 = vsel %vm488, %v481, %v485
          %v490 = vand.u32 2147483647, %v480
          %vm491 = vcmp.eq.f32.partialorder %v490, 8.507059e+37
          %v492 = vand.u32 %v480, 2147483648
          %v493 = vor.u32 1.1754944e-38, %v492
          %v494 = vsel %vm491, %v493, %v489
          %v495 = vmul.f32 %v477, %v494
          %v496 = vmax.f32 %v452, %v459
          %v497 = vmin.f32 %v448, %v455
          %v498 = vsub.f32 %v496, %v497
          %v499 = vmax.f32 %v454, %v461
          %v500 = vmin.f32 %v450, %v457
          %v501 = vsub.f32 %v499, %v500
          %v502 = vmul.f32 %v498, %v501
          %v503 = vadd.f32 %v502, 1e-06
          %v504 = vsub.f32 %v503, %v480
          %v505 = vrcp.pop %v503
          %v506 = vmul.f32 %v503, %v505
          %v507 = vsub.f32 1.0, %v506
          %v508 = vmul.f32 %v505, %v507
          %v509 = vadd.f32 %v505, %v508
          %vm510 = vweird.f32 %v503
          %vm511 = vweird.f32 %v505
          %vm512 = vmor %vm510, %vm511
          %v513 = vsel %vm512, %v505, %v509
          %v514 = vand.u32 2147483647, %v503
          %vm515 = vcmp.eq.f32.partialorder %v514, 8.507059e+37
          %v516 = vand.u32 %v503, 2147483648
          %v517 = vor.u32 1.1754944e-38, %v516
          %v518 = vsel %vm515, %v517, %v513
          %v519 = vmul.f32 %v504, %v518
          %v520 = vsub.f32 %v495, %v519
          %v521 = vsub.f32 1.0, %v520
          %v522 = vmul.f32 %v521, %v462
          %vm523 = vcmask 1040384
          %v524 = vsel %vm523, %v522, 0.0
          %525 = vadd.xlane.f32.xlu0 %v524
          %v526 = vpop.xlane.xlu0 %525
          %v527 = vrot.slane %v526, 4
          %v528 = vadd.f32 %v526, %v527
          %v529 = vrot.slane %v528, 2
          %v530 = vadd.f32 %v528, %v529
          %v531 = vrot.slane %v530, 1
          %v532 = vadd.f32 %v530, %v531
          %s533 = vtos %v532
          %v534 = vstv %s533
          %v535 = vld [vmem:[%s6] sm:$0x1]
          %v536 = vld [vmem:[%s7] sm:$0x1]
          %v537 = vsub.f32 %v535, %v536
          %v538 = vand.u32 2147483647, %v537
          %vm539 = vcmp.lt.f32.partialorder %v538, 1.0
          %v540 = vmul.f32 %v538, 0.5
          %v541 = vmul.f32 %v540, %v538
          %v542 = vsub.f32 %v538, 0.5
          %v543 = vsel %vm539, %v541, %v542
          %v544 = vld [vmem:[%s8] sm:$0x1]
          %v545 = vmul.f32 %v543, %v544
          %v546 = vsel %vm523, %v545, 0.0
          %547 = vadd.xlane.f32.xlu0 %v546
          %v548 = vpop.xlane.xlu0 %547
          %v549 = vrot.slane %v548, 4
          %v550 = vadd.f32 %v548, %v549
          %v551 = vrot.slane %v550, 2
          %v552 = vadd.f32 %v550, %v551
          %v553 = vrot.slane %v552, 1
          %v554 = vadd.f32 %v552, %v553
          %s555 = vtos %v554
          %v556 = vstv %s555
          %v557 = vld [vmem:[%s9] sm:$0x1]
          %v558 = vld [vmem:[%s10] sm:$0x1]
          %v559 = vmax.f32 %v557, 0.0
          %v560 = vmul.f32 %v557, %v558
          %v561 = vsub.f32 %v559, %v560
          %v562 = vand.u32 2147483647, %v557
          %v563 = vsub.f32 0.0, %v562
          %v564 = vmul.f32 %v563, 1.442695
          %v565 = vpow.pop %v564
          %v566 = vadd.f32 %v565, 1.0
          %v567 = vlog2.pop %v566
          %v568 = vmul.f32 %v567, 0.6931472
          %v569 = vadd.f32 %v561, %v568
          %v570 = vld [vmem:[%s11] sm:$0x1]
          %v571 = vmul.f32 %v569, %v570
          %v572 = vsel %vm523, %v571, 0.0
          %573 = vadd.xlane.f32.xlu0 %v572
          %v574 = vpop.xlane.xlu0 %573
          %v575 = vrot.slane %v574, 4
          %v576 = vadd.f32 %v574, %v575
          %v577 = vrot.slane %v576, 2
          %v578 = vadd.f32 %v576, %v577
          %v579 = vrot.slane %v578, 1
          %v580 = vadd.f32 %v578, %v579
          %s581 = vtos %v580
          %v582 = vstv %s581
          %v583 = vld [vmem:[#allocation2] sm:$0x1]
          %s584 = sld [smem:[#allocation4]]
          %v585 = vstv %s584
          %v586 = vmul.f32 %v583, %v585
          %s587 = sld [smem:[#allocation4 + $0x1]]
          %v588 = vstv %s587
          %v589 = vmul.f32 %v534, %v588
          %s590 = sld [smem:[#allocation4 + $0x2]]
          %v591 = vstv %s590
          %v592 = vmul.f32 %v556, %v591
          %s593 = sld [smem:[#allocation4 + $0x3]]
          %v594 = vstv %s593
          %v595 = vmul.f32 %v582, %v594
          %v596 = vlaneseq
          %v597 = vand.u32 %v596, 127
          %vm598 = vcmp.eq.s32.totalorder %v597, 0
          %600 = vset.pattern.permute.xlu0 0
          %601 = vperm.xlu0 %600, %v586
          %v602 = vpop.permute.xlu0 %601
          %v604 = vperm.slane %v602, 0
          %v605 = vsel %vm598, %v604, 0.0
          %vm606 = vcmp.eq.s32.totalorder %v597, 1
          %v607 = vsel %vm606, %v589, 0.0
          %v608 = vadd.f32 %v605, %v607
          %vm609 = vcmp.eq.s32.totalorder %v597, 2
          %v610 = vsel %vm609, %v592, 0.0
          %v611 = vadd.f32 %v608, %v610
          %vm612 = vcmp.eq.s32.totalorder %v597, 3
          %v613 = vsel %vm612, %v595, 0.0
          %v614 = vadd.f32 %v611, %v613
          %615 = vst [vmem:[#allocation5] sm:$0x1] %v614
        $region72: #{vehicle_side_fcos_losses.1} parent=63 // pred_fallthru
          _
        // Predicated region
        $region73: #{vehicle_side_fcos_losses.1} parent=63 // pred_check
          %p616 = pneg %p286
        $region74: #{vehicle_side_fcos_losses.1} parent=63 // pred_check_branch
          %618 = sbr.rel (%p616) target = $region76
        $region75: #{vehicle_side_fcos_losses.1} parent=63 // pred_region
          %620 = vsyncadd [#allocation6], 0
          %s622 = sshll.u32 [#allocation5], 4
          %s623 = int_to_ptr.vmem [resolvable:$true] %s622
          %s624 = sshll.u32 %s12, 4
          %s625 = int_to_ptr.hbm [resolvable:$true] %s624
          %627 = dma.vmem_to_hbm [thread:$0]  %s623, 16, %s625, [#allocation6]
        $region76: #{vehicle_side_fcos_losses.1} parent=63 // pred_fallthru
          _
        // Predicated region
        $region77: #{vehicle_side_fcos_losses.1} parent=63 // pred_check
          %p628 = pneg %p286
        $region78: #{vehicle_side_fcos_losses.1} parent=63 // pred_check_branch
          %630 = sbr.rel (%p628) target = $region80
        $region79: #{vehicle_side_fcos_losses.1} parent=63 // pred_region
          %632 = dma.done [#allocation6], 16
        $region80: #{vehicle_side_fcos_losses.1} parent=63 // pred_fallthru
          _
      $region64: #{vehicle_side_fcos_losses.1} parent=5 // pred_fallthru
        _
      %p633 = scmp.le.s32.totalorder 2, %s27
      // Predicated region
      $region81: #{vehicle_side_fcos_losses.1} parent=5 // pred_check
        %p634 = pneg %p633
      $region82: #{vehicle_side_fcos_losses.1} parent=5 // pred_check_branch
        %636 = sbr.rel (%p634) target = $region84
      $region83: #{vehicle_side_fcos_losses.1} parent=5 // pred_region
        %s637 = ssub.s32 %s27, 2
      $region84: #{vehicle_side_fcos_losses.1} parent=5 // pred_fallthru
        _
    $region6: #{vehicle_side_fcos_losses.1} parent=1 // loop_footer
      %s31 = sadd.s32 1, %s27
    $region7: #{vehicle_side_fcos_losses.1} parent=1 // loop_footer_branch
      %26 = sbr.rel target = $region3
    $region8: #{vehicle_side_fcos_losses.1} parent=1 // loop_exit
      _
    %638 = vsyncpa [#allocation6], 1
    %s639 = scalar_lea.sflag [#allocation6], 1
    %640 = vsyncpa %s639, 1

</llo_original>
